<compile_context>
chip_gen: v6e
topology: v6e:2x2x1
jax: 0.10.0
libtpu: 0.0.40
codegen_flags: <defaults>
</compile_context>

<pallas_src>
import math

import jax
import jax.numpy as jnp
import numpy as np
from jax.experimental import pallas as pl
from jax.experimental.pallas import tpu as pltpu


def _cdiv(a, b):
    return (a + b - 1) // b


def _round_up(a, b):
    return _cdiv(a, b) * b


# ---------------------------------------------------------------------------
# Kernel body
# ---------------------------------------------------------------------------
def _pairwise_attention_kernel(x_ref, w_ref, gamma_ref, beta_ref,
                               gsig_ref, gbc_ref, o_ref):
    x = x_ref[...]                                        # (TB, D) f32

    # --- LayerNorm (eps=1e-6, biased variance, affine), f32 on the VPU ---
    mean = jnp.mean(x, axis=-1, keepdims=True)
    xc = x - mean
    var = jnp.mean(xc * xc, axis=-1, keepdims=True)
    xln = xc * jax.lax.rsqrt(var + 1e-6) * gamma_ref[...] + beta_ref[...]
    xb = xln.astype(jnp.bfloat16)                         # bf16 MXU inputs

    # --- q / (k0-k1) projections -> per-(head,pair) score -> tanh ---
    # w_ref is the stacked (4, D, D) bf16 weight: [Wq^T, (Wk0-Wk1)^T (dup'd
    # over the pair axis), 0.5*(Wv0+Wv1)^T (dup'd), (-1)^p*0.5*(Wv0-Wv1)^T].
    q = jnp.dot(xb, w_ref[0], preferred_element_type=jnp.float32)
    kd = jnp.dot(xb, w_ref[1], preferred_element_type=jnp.float32)
    # gsig carries (-1)^p / (2*sqrt(d_k)) per (head, pair) feature segment, so
    # s[:, 2h+p] = (scores_pp - scores_p,(1-p)) / 2 and the 2-way softmax
    # collapses to attn_self = 0.5 + 0.5*tanh(s).  Kept f32: it feeds tanh.
    s = jnp.dot(q * kd, gsig_ref[...],
                preferred_element_type=jnp.float32)       # (TB, 2H)
    t = jnp.tanh(s)                                       # EUP slot
    # g_bc is an exact 0/1 selection matrix and t is in [-1, 1] -> bf16 is a
    # near-lossless, MXU-native broadcast back to feature space.
    t_bcast = jnp.dot(t.astype(jnp.bfloat16), gbc_ref[...],
                      preferred_element_type=jnp.float32)  # (TB, D)

    # --- value path in sum/difference form + residual ---
    # out = attn_self*v_p + (1-attn_self)*v_{1-p}
    #     = 0.5*(v0+v1) + tanh(s)*[(-1)^p*0.5*(v0-v1)]
    vsh = jnp.dot(xb, w_ref[2], preferred_element_type=jnp.float32)
    vdh = jnp.dot(xb, w_ref[3], preferred_element_type=jnp.float32)
    o_ref[...] = vsh + t_bcast * vdh + x


# ---------------------------------------------------------------------------
# One-time parameter folding (host-side numpy; NOT in the per-call path)
# ---------------------------------------------------------------------------
def prepare_pairwise_attention(wq, wk, wv, gamma, beta, heads):
    """Fold all (head, pair) algebra into device constants, once per weights."""
    wq = np.asarray(wq, np.float32)
    wk = np.asarray(wk, np.float32)
    wv = np.asarray(wv, np.float32)
    gamma = np.asarray(gamma, np.float32)
    beta = np.asarray(beta, np.float32)

    d_model = wq.shape[0]
    d_k = d_model // heads // 2
    assert heads * 2 * d_k == d_model, "d_model must be divisible by 2*heads"

    wk_r = wk.reshape(heads, 2, d_k, d_model)
    wv_r = wv.reshape(heads, 2, d_k, d_model)
    kd = wk_r[:, 0] - wk_r[:, 1]                          # (H, d_k, D)
    vs = 0.5 * (wv_r[:, 0] + wv_r[:, 1])
    vd = 0.5 * (wv_r[:, 0] - wv_r[:, 1])
    # NOTE: kd / vs row blocks are duplicated across the pair axis (~25%
    # redundant MXU columns); dedup needs a post-matmul lane broadcast (XLU)
    # and only pays off in the MXU-bound regime (very large D and batch tile).
    w_kd = np.broadcast_to(kd[:, None],
                           (heads, 2, d_k, d_model)).reshape(d_model, d_model)
    w_vs = np.broadcast_to(vs[:, None],
                           (heads, 2, d_k, d_model)).reshape(d_model, d_model)
    w_vd = np.stack([vd, -vd], axis=1).reshape(d_model, d_model)
    w_stack = np.stack([wq.T, w_kd.T, w_vs.T, w_vd.T], axis=0)   # (4, D, D)

    seg = np.arange(d_model) // d_k                       # feature -> 2h+p
    sign = np.where(seg % 2 == 0, 1.0, -1.0).astype(np.float32)
    g_sig = np.zeros((d_model, 2 * heads), np.float32)
    g_sig[np.arange(d_model), seg] = sign / (2.0 * math.sqrt(d_k))
    g_bc = np.zeros((2 * heads, d_model), np.float32)
    g_bc[seg, np.arange(d_model)] = 1.0

    # bf16 weights: MXU-native on v6e/v7x, half the VMEM residency / HBM DMA.
    return dict(
        w=jnp.asarray(w_stack, dtype=jnp.bfloat16),
        gamma=jnp.asarray(gamma.reshape(1, d_model), dtype=jnp.float32),
        beta=jnp.asarray(beta.reshape(1, d_model), dtype=jnp.float32),
        gsig=jnp.asarray(g_sig, dtype=jnp.float32),
        gbc=jnp.asarray(g_bc, dtype=jnp.bfloat16),
    )


# ---------------------------------------------------------------------------
# Device-aware sizing helpers
# ---------------------------------------------------------------------------
def _device_vmem_capacity_bytes():
    try:
        cap = int(pltpu.get_tpu_info().vmem_capacity_bytes)
        if cap > 0:
            return cap
    except Exception:
        pass
    return 128 * 1024 * 1024


def _num_tensorcores_per_chip():
    # Only 2-TC parts (v7x) benefit from an even grid; on v5e/v6e the grid is
    # a serial loop so shrinking the tile only adds per-step overhead.
    try:
        kind = jax.devices()[0].device_kind.lower()
    except Exception:
        return 1
    return 2 if ("v7" in kind or "7x" in kind) else 1


# ---------------------------------------------------------------------------
# Wrapper
# ---------------------------------------------------------------------------
def pairwise_attention(x, params, *, tile_b=None):
    """Pallas TPU implementation of PairWiseAttention.forward (eval mode)."""
    if x.dtype != jnp.float32:
        x = x.astype(jnp.float32)
    bs, d_model = x.shape
    w = params["w"]
    assert w.shape[-1] == d_model

    # ~85% of per-core VMEM on v7x (64 MiB physical), flat 64 MiB on v5e/v6e.
    vmem_limit = min(64 * 1024 * 1024,
                     int(_device_vmem_capacity_bytes() * 0.85))
    vmem_limit = max(vmem_limit, 32 * 1024 * 1024)

    const_bytes = sum(int(params[k].size * params[k].dtype.itemsize)
                      for k in ("w", "gamma", "beta", "gsig", "gbc"))

    if tile_b is None:
        # VMEM-derived batch tile: double-buffered f32 x/out tiles plus ~6
        # row-sized f32 intermediates per row; constants are single-buffered.
        per_row_bytes = (2 * 2 * 4 + 6 * 4) * d_model
        budget = int(vmem_limit * 0.75) - const_bytes
        tile_b = max(8, budget // per_row_bytes)
        tile_b = min(tile_b, 2048, _round_up(bs, 8))
        tile_b = max(8, (tile_b // 8) * 8)
        n_tiles = _cdiv(bs, tile_b)
        if _num_tensorcores_per_chip() >= 2 and n_tiles > 1 and n_tiles % 2 == 1:
            tile_b = _round_up(_cdiv(bs, n_tiles + 1), 8)   # even grid for 2 TCs
    else:
        tile_b = max(8, _round_up(int(tile_b), 8))          # (8,128) block rule

    grid = _cdiv(bs, tile_b)

    def run(resident_consts):
        if resident_consts:
            # Constants live whole-array in VMEM: loaded once, single-buffered
            # (no per-grid-step DMA, half the resident weight footprint).
            def cspec(shape):
                return pl.BlockSpec(memory_space=pltpu.MemorySpace.VMEM)
        else:
            # Fallback: whole-array blocked specs (double-buffered constants).
            def cspec(shape):
                return pl.BlockSpec(shape, lambda *_: (0,) * len(shape))

        return pl.pallas_call(
            _pairwise_attention_kernel,
            # No host-side pad / slice: cdiv grid + ragged last block; Pallas
            # never writes OOB output rows and all kernel ops are row-wise, so
            # tail garbage stays confined to masked rows.
            out_shape=jax.ShapeDtypeStruct((bs, d_model), jnp.float32),
            grid=(grid,),
            in_specs=[
                pl.BlockSpec((tile_b, d_model), lambda i: (i, 0)),  # x tile
                cspec(w.shape),                                     # (4,D,D) bf16 weights
                cspec(params["gamma"].shape),                       # LN gamma
                cspec(params["beta"].shape),                        # LN beta
                cspec(params["gsig"].shape),                        # signed/scaled segment-sum
                cspec(params["gbc"].shape),                         # per-(head,pair) broadcast
            ],
            out_specs=pl.BlockSpec((tile_b, d_model), lambda i: (i, 0)),
            compiler_params=pltpu.CompilerParams(
                dimension_semantics=("parallel",),
                vmem_limit_bytes=vmem_limit),
        )(x, w, params["gamma"], params["beta"],
          params["gsig"], params["gbc"])

    try:
        return run(True)
    except Exception:
        # Robustness fallback for Pallas versions without unblocked-VMEM
        # operand support; numerics are identical.
        return run(False)


# ---------------------------------------------------------------------------
# Pure-JAX mirror of the PyTorch forward (for validation)
# ---------------------------------------------------------------------------
def reference(x, wq, wk, wv, gamma, beta, heads):
    bs, d_model = x.shape
    d_k = d_model // heads // 2
    mean = x.mean(-1, keepdims=True)
    var = ((x - mean) ** 2).mean(-1, keepdims=True)
    xln = (x - mean) / jnp.sqrt(var + 1e-6) * gamma + beta

    def proj(w):
        return (xln @ w.T).reshape(bs, 1, heads, 2, d_k).transpose(0, 2, 1, 3, 4)

    q, k, v = proj(wq), proj(wk), proj(wv)
    scores = jnp.einsum("bhlid,bhljd->bhlij", q, k) / math.sqrt(d_k)
    attn = jax.nn.softmax(scores, axis=-1)
    out = jnp.einsum("bhlij,bhljd->bhlid", attn, v).reshape(bs, d_model)
    return out + x


if __name__ == "__main__":
    heads, d_model = 4, 32
    key = jax.random.PRNGKey(0)
    kx, kq, kk, kv, kg, kb = jax.random.split(key, 6)

    lim = math.sqrt(6.0 / (d_model + d_model))   # xavier-uniform style init
    wq = jax.random.uniform(kq, (d_model, d_model), jnp.float32, -lim, lim)
    wk = jax.random.uniform(kk, (d_model, d_model), jnp.float32, -lim, lim)
    wv = jax.random.uniform(kv, (d_model, d_model), jnp.float32, -lim, lim)
    gamma = 1.0 + 0.1 * jax.random.normal(kg, (d_model,), jnp.float32)
    beta = 0.1 * jax.random.normal(kb, (d_model,), jnp.float32)

    # One-time parameter folding (outside the per-call path).
    params = prepare_pairwise_attention(wq, wk, wv, gamma, beta, heads)

    # Tolerance: bf16 MXU inputs (f32 accumulation) vs an all-f32 reference.
    TOL = dict(atol=4e-2, rtol=4e-2)

    # Case 1: small batch, single tile (auto tile size).
    x1 = jax.random.normal(kx, (8, d_model), jnp.float32)
    out1 = jax.block_until_ready(pairwise_attention(x1, params))
    ref1 = reference(x1, wq, wk, wv, gamma, beta, heads)
    np.testing.assert_allclose(np.asarray(out1), np.asarray(ref1), **TOL)

    # Case 2: batch not divisible by the tile -> ragged last block, no pad/slice.
    x2 = jax.random.normal(kx, (300, d_model), jnp.float32)
    out2 = jax.block_until_ready(pairwise_attention(x2, params, tile_b=128))
    ref2 = reference(x2, wq, wk, wv, gamma, beta, heads)
    np.testing.assert_allclose(np.asarray(out2), np.asarray(ref2), **TOL)

    print("KERNEL_OK")
</pallas_src>

<mosaic_0001>
module attributes {stable_mosaic.version = 11 : i64} {
  func.func @_pairwise_attention_kernel(%arg0: i32, %arg1: memref<8x32xf32, #tpu.memory_space<vmem>>, %arg2: memref<4x32x32xbf16, #tpu.memory_space<vmem>>, %arg3: memref<1x32xf32, #tpu.memory_space<vmem>>, %arg4: memref<1x32xf32, #tpu.memory_space<vmem>>, %arg5: memref<32x8xf32, #tpu.memory_space<vmem>>, %arg6: memref<8x32xbf16, #tpu.memory_space<vmem>>, %arg7: memref<8x32xf32, #tpu.memory_space<vmem>>) attributes {dimension_semantics = [#tpu.dimension_semantics<parallel>], iteration_bounds = array<i64: 1>, scalar_prefetch = 0 : i64, scratch_operands = 0 : i64, tpu.core_type = #tpu.core_type<tc>, window_params = [{transform_indices = @transform_0, window_bounds = array<i64: 8, 32>}, {pipeline_mode = #tpu.pipeline_mode<synchronous>, transform_indices = @transform_1, window_bounds = array<i64: 4, 32, 32>}, {pipeline_mode = #tpu.pipeline_mode<synchronous>, transform_indices = @transform_2, window_bounds = array<i64: 1, 32>}, {pipeline_mode = #tpu.pipeline_mode<synchronous>, transform_indices = @transform_3, window_bounds = array<i64: 1, 32>}, {pipeline_mode = #tpu.pipeline_mode<synchronous>, transform_indices = @transform_4, window_bounds = array<i64: 32, 8>}, {pipeline_mode = #tpu.pipeline_mode<synchronous>, transform_indices = @transform_5, window_bounds = array<i64: 8, 32>}, {transform_indices = @transform_6, window_bounds = array<i64: 8, 32>}]} {
    %c0 = arith.constant 0 : index
    %c0_0 = arith.constant 0 : index
    %0 = vector.load %arg1[%c0, %c0_0] : memref<8x32xf32, #tpu.memory_space<vmem>>, vector<8x32xf32>
    %cst = arith.constant dense<0.000000e+00> : vector<8xf32>
    %1 = vector.multi_reduction <add>, %0, %cst [1] : vector<8x32xf32> to vector<8xf32>
    %2 = vector.shape_cast %1 : vector<8xf32> to vector<8x1xf32>
    %cst_1 = arith.constant 3.200000e+01 : f32
    %3 = vector.broadcast %cst_1 : f32 to vector<8x1xf32>
    %4 = arith.divf %2, %3 : vector<8x1xf32>
    %5 = vector.broadcast %4 : vector<8x1xf32> to vector<8x32xf32>
    %6 = arith.subf %0, %5 : vector<8x32xf32>
    %7 = arith.mulf %6, %6 : vector<8x32xf32>
    %cst_2 = arith.constant dense<0.000000e+00> : vector<8xf32>
    %8 = vector.multi_reduction <add>, %7, %cst_2 [1] : vector<8x32xf32> to vector<8xf32>
    %9 = vector.shape_cast %8 : vector<8xf32> to vector<8x1xf32>
    %cst_3 = arith.constant 3.200000e+01 : f32
    %10 = vector.broadcast %cst_3 : f32 to vector<8x1xf32>
    %11 = arith.divf %9, %10 : vector<8x1xf32>
    %cst_4 = arith.constant 9.99999997E-7 : f32
    %12 = vector.broadcast %cst_4 : f32 to vector<8x1xf32>
    %13 = arith.addf %11, %12 : vector<8x1xf32>
    %14 = math.rsqrt %13 : vector<8x1xf32>
    %15 = vector.broadcast %14 : vector<8x1xf32> to vector<8x32xf32>
    %16 = arith.mulf %6, %15 : vector<8x32xf32>
    %c0_5 = arith.constant 0 : index
    %c0_6 = arith.constant 0 : index
    %17 = vector.load %arg3[%c0_5, %c0_6] : memref<1x32xf32, #tpu.memory_space<vmem>>, vector<1x32xf32>
    %18 = vector.broadcast %17 : vector<1x32xf32> to vector<8x32xf32>
    %19 = arith.mulf %16, %18 : vector<8x32xf32>
    %c0_7 = arith.constant 0 : index
    %c0_8 = arith.constant 0 : index
    %20 = vector.load %arg4[%c0_7, %c0_8] : memref<1x32xf32, #tpu.memory_space<vmem>>, vector<1x32xf32>
    %21 = vector.broadcast %20 : vector<1x32xf32> to vector<8x32xf32>
    %22 = arith.addf %19, %21 : vector<8x32xf32>
    %23 = arith.truncf %22 : vector<8x32xf32> to vector<8x32xbf16>
    %c0_9 = arith.constant 0 : index
    %c0_10 = arith.constant 0 : index
    %c0_11 = arith.constant 0 : index
    %24 = vector.load %arg2[%c0_9, %c0_10, %c0_11] : memref<4x32x32xbf16, #tpu.memory_space<vmem>>, vector<1x32x32xbf16>
    %25 = vector.shape_cast %24 : vector<1x32x32xbf16> to vector<32x32xbf16>
    %cst_12 = arith.constant dense<0.000000e+00> : vector<8x32xf32>
    %26 = tpu.matmul %23, %25, %cst_12 {dimension_numbers = #tpu.dot_dimension_numbers<[1], [0], [0], [1], [0, 0, 1, 1], [], []>} : vector<8x32xbf16>, vector<32x32xbf16>, vector<8x32xf32> -> vector<8x32xf32>
    %c1 = arith.constant 1 : index
    %c0_13 = arith.constant 0 : index
    %c0_14 = arith.constant 0 : index
    %27 = vector.load %arg2[%c1, %c0_13, %c0_14] : memref<4x32x32xbf16, #tpu.memory_space<vmem>>, vector<1x32x32xbf16>
    %28 = vector.shape_cast %27 : vector<1x32x32xbf16> to vector<32x32xbf16>
    %cst_15 = arith.constant dense<0.000000e+00> : vector<8x32xf32>
    %29 = tpu.matmul %23, %28, %cst_15 {dimension_numbers = #tpu.dot_dimension_numbers<[1], [0], [0], [1], [0, 0, 1, 1], [], []>} : vector<8x32xbf16>, vector<32x32xbf16>, vector<8x32xf32> -> vector<8x32xf32>
    %30 = arith.mulf %26, %29 : vector<8x32xf32>
    %c0_16 = arith.constant 0 : index
    %c0_17 = arith.constant 0 : index
    %31 = vector.load %arg5[%c0_16, %c0_17] : memref<32x8xf32, #tpu.memory_space<vmem>>, vector<32x8xf32>
    %cst_18 = arith.constant dense<0.000000e+00> : vector<8x8xf32>
    %32 = tpu.matmul %30, %31, %cst_18 {dimension_numbers = #tpu.dot_dimension_numbers<[1], [0], [0], [1], [0, 0, 1, 1], [], []>} : vector<8x32xf32>, vector<32x8xf32>, vector<8x8xf32> -> vector<8x8xf32>
    %33 = math.tanh %32 : vector<8x8xf32>
    %34 = arith.truncf %33 : vector<8x8xf32> to vector<8x8xbf16>
    %c0_19 = arith.constant 0 : index
    %c0_20 = arith.constant 0 : index
    %35 = vector.load %arg6[%c0_19, %c0_20] : memref<8x32xbf16, #tpu.memory_space<vmem>>, vector<8x32xbf16>
    %cst_21 = arith.constant dense<0.000000e+00> : vector<8x32xf32>
    %36 = tpu.matmul %34, %35, %cst_21 {dimension_numbers = #tpu.dot_dimension_numbers<[1], [0], [0], [1], [0, 0, 1, 1], [], []>} : vector<8x8xbf16>, vector<8x32xbf16>, vector<8x32xf32> -> vector<8x32xf32>
    %c2 = arith.constant 2 : index
    %c0_22 = arith.constant 0 : index
    %c0_23 = arith.constant 0 : index
    %37 = vector.load %arg2[%c2, %c0_22, %c0_23] : memref<4x32x32xbf16, #tpu.memory_space<vmem>>, vector<1x32x32xbf16>
    %38 = vector.shape_cast %37 : vector<1x32x32xbf16> to vector<32x32xbf16>
    %cst_24 = arith.constant dense<0.000000e+00> : vector<8x32xf32>
    %39 = tpu.matmul %23, %38, %cst_24 {dimension_numbers = #tpu.dot_dimension_numbers<[1], [0], [0], [1], [0, 0, 1, 1], [], []>} : vector<8x32xbf16>, vector<32x32xbf16>, vector<8x32xf32> -> vector<8x32xf32>
    %c3 = arith.constant 3 : index
    %c0_25 = arith.constant 0 : index
    %c0_26 = arith.constant 0 : index
    %40 = vector.load %arg2[%c3, %c0_25, %c0_26] : memref<4x32x32xbf16, #tpu.memory_space<vmem>>, vector<1x32x32xbf16>
    %41 = vector.shape_cast %40 : vector<1x32x32xbf16> to vector<32x32xbf16>
    %cst_27 = arith.constant dense<0.000000e+00> : vector<8x32xf32>
    %42 = tpu.matmul %23, %41, %cst_27 {dimension_numbers = #tpu.dot_dimension_numbers<[1], [0], [0], [1], [0, 0, 1, 1], [], []>} : vector<8x32xbf16>, vector<32x32xbf16>, vector<8x32xf32> -> vector<8x32xf32>
    %43 = arith.mulf %36, %42 : vector<8x32xf32>
    %44 = arith.addf %39, %43 : vector<8x32xf32>
    %45 = arith.addf %44, %0 : vector<8x32xf32>
    %c0_28 = arith.constant 0 : index
    %c0_29 = arith.constant 0 : index
    %46 = vector.load %arg7[%c0_28, %c0_29] : memref<8x32xf32, #tpu.memory_space<vmem>>, vector<8x32xf32>
    tpu.vector_store %arg7[%c0_28, %c0_29], %45 {strides = array<i32>} : memref<8x32xf32, #tpu.memory_space<vmem>>, vector<8x32xf32>,
    return
  }
  func.func @transform_0(%arg0: i32) -> (i32, i32) {
    %c0_i32 = arith.constant 0 : i32
    %c0_i32_0 = arith.constant 0 : i32
    return %arg0, %c0_i32 : i32, i32
  }
  func.func @transform_1(%arg0: i32) -> (i32, i32, i32) {
    %c0_i32 = arith.constant 0 : i32
    %c0_i32_0 = arith.constant 0 : i32
    %c0_i32_1 = arith.constant 0 : i32
    %c0_i32_2 = arith.constant 0 : i32
    return %c0_i32, %c0_i32_0, %c0_i32_1 : i32, i32, i32
  }
  func.func @transform_2(%arg0: i32) -> (i32, i32) {
    %c0_i32 = arith.constant 0 : i32
    %c0_i32_0 = arith.constant 0 : i32
    %c0_i32_1 = arith.constant 0 : i32
    return %c0_i32, %c0_i32_0 : i32, i32
  }
  func.func @transform_3(%arg0: i32) -> (i32, i32) {
    %c0_i32 = arith.constant 0 : i32
    %c0_i32_0 = arith.constant 0 : i32
    %c0_i32_1 = arith.constant 0 : i32
    return %c0_i32, %c0_i32_0 : i32, i32
  }
  func.func @transform_4(%arg0: i32) -> (i32, i32) {
    %c0_i32 = arith.constant 0 : i32
    %c0_i32_0 = arith.constant 0 : i32
    %c0_i32_1 = arith.constant 0 : i32
    return %c0_i32, %c0_i32_0 : i32, i32
  }
  func.func @transform_5(%arg0: i32) -> (i32, i32) {
    %c0_i32 = arith.constant 0 : i32
    %c0_i32_0 = arith.constant 0 : i32
    %c0_i32_1 = arith.constant 0 : i32
    return %c0_i32, %c0_i32_0 : i32, i32
  }
  func.func @transform_6(%arg0: i32) -> (i32, i32) {
    %c0_i32 = arith.constant 0 : i32
    %c0_i32_0 = arith.constant 0 : i32
    return %arg0, %c0_i32 : i32, i32
  }
}

module attributes {stable_mosaic.version = 11 : i64} {
  func.func @_pairwise_attention_kernel(%arg0: i32, %arg1: memref<8x32xf32, #tpu.memory_space<vmem>>, %arg2: memref<4x32x32xbf16, #tpu.memory_space<vmem>>, %arg3: memref<1x32xf32, #tpu.memory_space<vmem>>, %arg4: memref<1x32xf32, #tpu.memory_space<vmem>>, %arg5: memref<32x8xf32, #tpu.memory_space<vmem>>, %arg6: memref<8x32xbf16, #tpu.memory_space<vmem>>, %arg7: memref<8x32xf32, #tpu.memory_space<vmem>>) attributes {dimension_semantics = [#tpu.dimension_semantics<parallel>], iteration_bounds = array<i64: 1>, scalar_prefetch = 0 : i64, scratch_operands = 0 : i64, tpu.core_type = #tpu.core_type<tc>, window_params = [{transform_indices = @transform_0, window_bounds = array<i64: 8, 32>}, {pipeline_mode = #tpu.pipeline_mode<synchronous>, transform_indices = @transform_1, window_bounds = array<i64: 4, 32, 32>}, {pipeline_mode = #tpu.pipeline_mode<synchronous>, transform_indices = @transform_2, window_bounds = array<i64: 1, 32>}, {pipeline_mode = #tpu.pipeline_mode<synchronous>, transform_indices = @transform_3, window_bounds = array<i64: 1, 32>}, {pipeline_mode = #tpu.pipeline_mode<synchronous>, transform_indices = @transform_4, window_bounds = array<i64: 32, 8>}, {pipeline_mode = #tpu.pipeline_mode<synchronous>, transform_indices = @transform_5, window_bounds = array<i64: 8, 32>}, {transform_indices = @transform_6, window_bounds = array<i64: 8, 32>}]} {
    %c0 = arith.constant 0 : index
    %c0_0 = arith.constant 0 : index
    %0 = vector.load %arg1[%c0, %c0_0] : memref<8x32xf32, #tpu.memory_space<vmem>>, vector<8x32xf32>
    %cst = arith.constant dense<0.000000e+00> : vector<8xf32>
    %1 = vector.multi_reduction <add>, %0, %cst [1] : vector<8x32xf32> to vector<8xf32>
    %2 = vector.shape_cast %1 : vector<8xf32> to vector<8x1xf32>
    %cst_1 = arith.constant 3.200000e+01 : f32
    %3 = vector.broadcast %cst_1 : f32 to vector<8x1xf32>
    %4 = arith.divf %2, %3 : vector<8x1xf32>
    %5 = vector.broadcast %4 : vector<8x1xf32> to vector<8x32xf32>
    %6 = arith.subf %0, %5 : vector<8x32xf32>
    %7 = arith.mulf %6, %6 : vector<8x32xf32>
    %cst_2 = arith.constant dense<0.000000e+00> : vector<8xf32>
    %8 = vector.multi_reduction <add>, %7, %cst_2 [1] : vector<8x32xf32> to vector<8xf32>
    %9 = vector.shape_cast %8 : vector<8xf32> to vector<8x1xf32>
    %cst_3 = arith.constant 3.200000e+01 : f32
    %10 = vector.broadcast %cst_3 : f32 to vector<8x1xf32>
    %11 = arith.divf %9, %10 : vector<8x1xf32>
    %cst_4 = arith.constant 9.99999997E-7 : f32
    %12 = vector.broadcast %cst_4 : f32 to vector<8x1xf32>
    %13 = arith.addf %11, %12 : vector<8x1xf32>
    %14 = math.rsqrt %13 : vector<8x1xf32>
    %15 = vector.broadcast %14 : vector<8x1xf32> to vector<8x32xf32>
    %16 = arith.mulf %6, %15 : vector<8x32xf32>
    %c0_5 = arith.constant 0 : index
    %c0_6 = arith.constant 0 : index
    %17 = vector.load %arg3[%c0_5, %c0_6] : memref<1x32xf32, #tpu.memory_space<vmem>>, vector<1x32xf32>
    %18 = vector.broadcast %17 : vector<1x32xf32> to vector<8x32xf32>
    %19 = arith.mulf %16, %18 : vector<8x32xf32>
    %c0_7 = arith.constant 0 : index
    %c0_8 = arith.constant 0 : index
    %20 = vector.load %arg4[%c0_7, %c0_8] : memref<1x32xf32, #tpu.memory_space<vmem>>, vector<1x32xf32>
    %21 = vector.broadcast %20 : vector<1x32xf32> to vector<8x32xf32>
    %22 = arith.addf %19, %21 : vector<8x32xf32>
    %23 = arith.truncf %22 : vector<8x32xf32> to vector<8x32xbf16>
    %c0_9 = arith.constant 0 : index
    %c0_10 = arith.constant 0 : index
    %c0_11 = arith.constant 0 : index
    %24 = vector.load %arg2[%c0_9, %c0_10, %c0_11] : memref<4x32x32xbf16, #tpu.memory_space<vmem>>, vector<1x32x32xbf16>
    %25 = vector.shape_cast %24 : vector<1x32x32xbf16> to vector<32x32xbf16>
    %cst_12 = arith.constant dense<0.000000e+00> : vector<8x32xf32>
    %26 = tpu.matmul %23, %25, %cst_12 {dimension_numbers = #tpu.dot_dimension_numbers<[1], [0], [0], [1], [0, 0, 1, 1], [], []>} : vector<8x32xbf16>, vector<32x32xbf16>, vector<8x32xf32> -> vector<8x32xf32>
    %c1 = arith.constant 1 : index
    %c0_13 = arith.constant 0 : index
    %c0_14 = arith.constant 0 : index
    %27 = vector.load %arg2[%c1, %c0_13, %c0_14] : memref<4x32x32xbf16, #tpu.memory_space<vmem>>, vector<1x32x32xbf16>
    %28 = vector.shape_cast %27 : vector<1x32x32xbf16> to vector<32x32xbf16>
    %cst_15 = arith.constant dense<0.000000e+00> : vector<8x32xf32>
    %29 = tpu.matmul %23, %28, %cst_15 {dimension_numbers = #tpu.dot_dimension_numbers<[1], [0], [0], [1], [0, 0, 1, 1], [], []>} : vector<8x32xbf16>, vector<32x32xbf16>, vector<8x32xf32> -> vector<8x32xf32>
    %30 = arith.mulf %26, %29 : vector<8x32xf32>
    %c0_16 = arith.constant 0 : index
    %c0_17 = arith.constant 0 : index
    %31 = vector.load %arg5[%c0_16, %c0_17] : memref<32x8xf32, #tpu.memory_space<vmem>>, vector<32x8xf32>
    %cst_18 = arith.constant dense<0.000000e+00> : vector<8x8xf32>
    %32 = tpu.matmul %30, %31, %cst_18 {dimension_numbers = #tpu.dot_dimension_numbers<[1], [0], [0], [1], [0, 0, 1, 1], [], []>} : vector<8x32xf32>, vector<32x8xf32>, vector<8x8xf32> -> vector<8x8xf32>
    %33 = math.tanh %32 : vector<8x8xf32>
    %34 = arith.truncf %33 : vector<8x8xf32> to vector<8x8xbf16>
    %c0_19 = arith.constant 0 : index
    %c0_20 = arith.constant 0 : index
    %35 = vector.load %arg6[%c0_19, %c0_20] : memref<8x32xbf16, #tpu.memory_space<vmem>>, vector<8x32xbf16>
    %cst_21 = arith.constant dense<0.000000e+00> : vector<8x32xf32>
    %36 = tpu.matmul %34, %35, %cst_21 {dimension_numbers = #tpu.dot_dimension_numbers<[1], [0], [0], [1], [0, 0, 1, 1], [], []>} : vector<8x8xbf16>, vector<8x32xbf16>, vector<8x32xf32> -> vector<8x32xf32>
    %c2 = arith.constant 2 : index
    %c0_22 = arith.constant 0 : index
    %c0_23 = arith.constant 0 : index
    %37 = vector.load %arg2[%c2, %c0_22, %c0_23] : memref<4x32x32xbf16, #tpu.memory_space<vmem>>, vector<1x32x32xbf16>
    %38 = vector.shape_cast %37 : vector<1x32x32xbf16> to vector<32x32xbf16>
    %cst_24 = arith.constant dense<0.000000e+00> : vector<8x32xf32>
    %39 = tpu.matmul %23, %38, %cst_24 {dimension_numbers = #tpu.dot_dimension_numbers<[1], [0], [0], [1], [0, 0, 1, 1], [], []>} : vector<8x32xbf16>, vector<32x32xbf16>, vector<8x32xf32> -> vector<8x32xf32>
    %c3 = arith.constant 3 : index
    %c0_25 = arith.constant 0 : index
    %c0_26 = arith.constant 0 : index
    %40 = vector.load %arg2[%c3, %c0_25, %c0_26] : memref<4x32x32xbf16, #tpu.memory_space<vmem>>, vector<1x32x32xbf16>
    %41 = vector.shape_cast %40 : vector<1x32x32xbf16> to vector<32x32xbf16>
    %cst_27 = arith.constant dense<0.000000e+00> : vector<8x32xf32>
    %42 = tpu.matmul %23, %41, %cst_27 {dimension_numbers = #tpu.dot_dimension_numbers<[1], [0], [0], [1], [0, 0, 1, 1], [], []>} : vector<8x32xbf16>, vector<32x32xbf16>, vector<8x32xf32> -> vector<8x32xf32>
    %43 = arith.mulf %36, %42 : vector<8x32xf32>
    %44 = arith.addf %39, %43 : vector<8x32xf32>
    %45 = arith.addf %44, %0 : vector<8x32xf32>
    %c0_28 = arith.constant 0 : index
    %c0_29 = arith.constant 0 : index
    %46 = vector.load %arg7[%c0_28, %c0_29] : memref<8x32xf32, #tpu.memory_space<vmem>>, vector<8x32xf32>
    tpu.vector_store %arg7[%c0_28, %c0_29], %45 {strides = array<i32>} : memref<8x32xf32, #tpu.memory_space<vmem>>, vector<8x32xf32>,
    return
  }
  func.func @transform_0(%arg0: i32) -> (i32, i32) {
    %c0_i32 = arith.constant 0 : i32
    %c0_i32_0 = arith.constant 0 : i32
    return %arg0, %c0_i32 : i32, i32
  }
  func.func @transform_1(%arg0: i32) -> (i32, i32, i32) {
    %c0_i32 = arith.constant 0 : i32
    %c0_i32_0 = arith.constant 0 : i32
    %c0_i32_1 = arith.constant 0 : i32
    %c0_i32_2 = arith.constant 0 : i32
    return %c0_i32, %c0_i32_0, %c0_i32_1 : i32, i32, i32
  }
  func.func @transform_2(%arg0: i32) -> (i32, i32) {
    %c0_i32 = arith.constant 0 : i32
    %c0_i32_0 = arith.constant 0 : i32
    %c0_i32_1 = arith.constant 0 : i32
    return %c0_i32, %c0_i32_0 : i32, i32
  }
  func.func @transform_3(%arg0: i32) -> (i32, i32) {
    %c0_i32 = arith.constant 0 : i32
    %c0_i32_0 = arith.constant 0 : i32
    %c0_i32_1 = arith.constant 0 : i32
    return %c0_i32, %c0_i32_0 : i32, i32
  }
  func.func @transform_4(%arg0: i32) -> (i32, i32) {
    %c0_i32 = arith.constant 0 : i32
    %c0_i32_0 = arith.constant 0 : i32
    %c0_i32_1 = arith.constant 0 : i32
    return %c0_i32, %c0_i32_0 : i32, i32
  }
  func.func @transform_5(%arg0: i32) -> (i32, i32) {
    %c0_i32 = arith.constant 0 : i32
    %c0_i32_0 = arith.constant 0 : i32
    %c0_i32_1 = arith.constant 0 : i32
    return %c0_i32, %c0_i32_0 : i32, i32
  }
  func.func @transform_6(%arg0: i32) -> (i32, i32) {
    %c0_i32 = arith.constant 0 : i32
    %c0_i32_0 = arith.constant 0 : i32
    return %arg0, %c0_i32 : i32, i32
  }
}

</mosaic_0001>

<llo_original>
// kernel: tpu_custom_call.1
$region0: #{tpu_custom_call.1}
  #allocation0 [shape = 'u32[]', space=smem, size = 0x4, offset = 0x4, fixed_abs, tag = 'smem constant byte address 0x4 - core index']
  #allocation1 [shape = 'u32[144,128]{1,0:T(1,128)}', space=vmem, size = 0x12000, scoped, tag = 'internal scratch']
  %s0 = inlined_call_operand.vmem [shape: f32[8,32], index: 0, kind: input, shape index: {}]
  %s1 = inlined_call_operand.hbm [shape: bf16[4,32,32], index: 1, kind: input, shape index: {}]
  %s2 = inlined_call_operand.vmem [shape: f32[1,32], index: 2, kind: input, shape index: {}]
  %s3 = inlined_call_operand.vmem [shape: f32[1,32], index: 3, kind: input, shape index: {}]
  %s4 = inlined_call_operand.vmem [shape: f32[32,8], index: 4, kind: input, shape index: {}]
  %s5 = inlined_call_operand.vmem [shape: bf16[8,32], index: 5, kind: input, shape index: {}]
  %s6 = inlined_call_operand.hbm [shape: f32[8,32], index: 6, kind: output, shape index: {}]
  %s7 = sld [smem:[#allocation0]]
  $region38: #{tpu_custom_call.1} parent=0
    _
  %s9 = ssub.s32 1, %s7
  %s10 = scalar_select 0, %s9, %s7
  $region1: #{tpu_custom_call.1} parent=0
    #allocation2 [shape = 'u8[32768]{0}', space=vmem, size = 0x8000, scoped, tag = 'input window, operand 1, single buffered']
    #allocation3 [shape = 's32[1]{0}', space=sflag, size = 0x4, scoped, tag = 'scoped memory for tpu_custom_call.1']
    #allocation4 [shape = 's32[1]{0}', space=sflag, size = 0x4, scoped, tag = 'scoped memory for tpu_custom_call.1']
    #allocation5 [shape = 'u8[4096]{0}', space=vmem, size = 0x1000, scoped, tag = 'output window, operand 0, single buffered']
    %11 = vsyncpa [#allocation3], 0
    %12 = vsyncpa [#allocation4], 0
    // Predicated region
    $region2: #{tpu_custom_call.1} parent=1 // pred_check
      _
    $region3: #{tpu_custom_call.1} parent=1 // pred_check_branch
      %14 = sbr.rel (0) target = $region5
    $region4: #{tpu_custom_call.1} parent=1 // pred_region
      _
    $region5: #{tpu_custom_call.1} parent=1 // pred_fallthru
      _
    // Predicated region
    $region6: #{tpu_custom_call.1} parent=1 // pred_check
      _
    $region7: #{tpu_custom_call.1} parent=1 // pred_check_branch
      %16 = sbr.rel (0) target = $region9
    $region8: #{tpu_custom_call.1} parent=1 // pred_region
      %s18 = ssub.s32 1024, 1024
      %19 = vsyncadd [#allocation3], %s18
      %s20 = sshll.u32 [#allocation2], 4
      %s21 = int_to_ptr.vmem [resolvable:$true] %s20
      %26 = dma.hbm_to_vmem [thread:$0]  %s1, 1024, %s21, [#allocation3], 64, 64, 4
    $region9: #{tpu_custom_call.1} parent=1 // pred_fallthru
      _
    // Predicated region
    $region10: #{tpu_custom_call.1} parent=1 // pred_check
      _
    $region11: #{tpu_custom_call.1} parent=1 // pred_check_branch
      %28 = sbr.rel (0) target = $region13
    $region12: #{tpu_custom_call.1} parent=1 // pred_region
      _
    $region13: #{tpu_custom_call.1} parent=1 // pred_fallthru
      _
    // Predicated region
    $region14: #{tpu_custom_call.1} parent=1 // pred_check
      _
    $region15: #{tpu_custom_call.1} parent=1 // pred_check_branch
      %30 = sbr.rel (0) target = $region17
    $region16: #{tpu_custom_call.1} parent=1 // pred_region
      _
    $region17: #{tpu_custom_call.1} parent=1 // pred_fallthru
      _
    // Predicated region
    $region18: #{tpu_custom_call.1} parent=1 // pred_check
      _
    $region19: #{tpu_custom_call.1} parent=1 // pred_check_branch
      %32 = sbr.rel (0) target = $region21
    $region20: #{tpu_custom_call.1} parent=1 // pred_region
      _
    $region21: #{tpu_custom_call.1} parent=1 // pred_fallthru
      _
    // Predicated region
    $region22: #{tpu_custom_call.1} parent=1 // pred_check
      _
    $region23: #{tpu_custom_call.1} parent=1 // pred_check_branch
      %34 = sbr.rel (0) target = $region25
    $region24: #{tpu_custom_call.1} parent=1 // pred_region
      _
    $region25: #{tpu_custom_call.1} parent=1 // pred_fallthru
      _
    // Predicated region
    $region26: #{tpu_custom_call.1} parent=1 // pred_check
      _
    $region27: #{tpu_custom_call.1} parent=1 // pred_check_branch
      %36 = sbr.rel (0) target = $region29
    $region28: #{tpu_custom_call.1} parent=1 // pred_region
      %37 = dma.done [#allocation3], 1024
    $region29: #{tpu_custom_call.1} parent=1 // pred_fallthru
      _
    %v39 = vld [vmem:[%s0] sm:$0xff]
    %vm40 = vcmask 261120
    %v41 = vsel %vm40, %v39, 0.0
    %42 = vadd.xlane.f32.xlu0 %v41
    %v43 = vpop.xlane.xlu0 %42
    %v44 = vrcp.pop 32.0
    %v45 = vmul.f32 %v43, %v44
    %v46 = vsub.f32 %v39, %v45
    %v47 = vmul.f32 %v46, %v46
    %v48 = vsel %vm40, %v47, 0.0
    %49 = vadd.xlane.f32.xlu0 %v48
    %v50 = vpop.xlane.xlu0 %49
    %v51 = vmul.f32 %v50, %v44
    %v52 = vadd.f32 %v51, 1e-06
    %v53 = vrsqrt.pop %v52
    %v54 = vmul.f32 %v46, %v53
    %v55 = vld [vmem:[%s2] sm:$0x1]
    %v57 = vlaneseq
    %v58 = vshrl.u32 %v57, 7
    %v59 = vsub.s32 0, %v58
    %v60 = vrot.slane %v55, %v59
    %v62 = vmul.f32 %v54, %v60
    %v63 = vld [vmem:[%s3] sm:$0x1]
    %v65 = vlaneseq
    %v66 = vshrl.u32 %v65, 7
    %v67 = vsub.s32 0, %v66
    %v68 = vrot.slane %v63, %v67
    %v70 = vadd.f32 %v62, %v68
    %v71 = vpack.c.bf16 %v70, %v70
    %v72 = vld [vmem:[#allocation2] sm:$0xf]
    %v73 = vld [vmem:[#allocation2 + $0x4] sm:$0xf]
    %v74 = vld [vmem:[#allocation2 + $0x8] sm:$0xf]
    %v75 = vld [vmem:[#allocation2 + $0xc] sm:$0xf]
    %v80 = vunpack.c.l.b16 %v72
    %v81 = vunpack.c.l.b16 %v73
    %v82 = vunpack.c.l.b16 %v74
    %v83 = vunpack.c.l.b16 %v75
    %v84 = vpack.c.b16 %v81, %v80
    %v85 = vpack.c.b16 %v83, %v82
    %v89 = vsel %vm40, %v71, 0
    %91 = vmatprep.subr.bf16.mxu0 0
    %92 = vmatpush1.bf16.msra.mxu0 0
    %93 = vmatprep.subr.bf16.mxu0 0
    %94 = vmatpush1.bf16.msra.mxu0 0
    %95 = vmatprep.subr.bf16.mxu0 0
    %96 = vmatpush1.bf16.msra.mxu0 0
    %97 = vmatprep.subr.bf16.mxu0 0
    %98 = vmatpush1.bf16.msra.mxu0 0
    %99 = vmatprep.subr.bf16.mxu0 0
    %100 = vmatpush1.bf16.msra.mxu0 0
    %101 = vmatprep.subr.bf16.mxu0 0
    %102 = vmatpush1.bf16.msra.mxu0 0
    %103 = vmatprep.subr.bf16.mxu0 0
    %104 = vmatpush1.bf16.msra.mxu0 %v85
    %105 = vmatprep.subr.bf16.mxu0 0
    %106 = vmatpush1.bf16.msra.mxu0 %v84
    %107 = vmatprep.subr.bf16.mxu0 0
    %108 = vmatpush2.bf16.msra.mxu0 0
    %109 = vmatprep.subr.bf16.mxu0 0
    %110 = vmatpush2.bf16.msra.mxu0 0
    %111 = vmatprep.subr.bf16.mxu0 0
    %112 = vmatpush2.bf16.msra.mxu0 0
    %113 = vmatprep.subr.bf16.mxu0 0
    %114 = vmatpush2.bf16.msra.mxu0 0
    %115 = vmatprep.subr.bf16.mxu0 0
    %116 = vmatpush2.bf16.msra.mxu0 0
    %117 = vmatprep.subr.bf16.mxu0 0
    %118 = vmatpush2.bf16.msra.mxu0 0
    %119 = vmatprep.subr.bf16.mxu0 0
    %120 = vmatpush2.bf16.msra.mxu0 0
    %121 = vmatprep.subr.bf16.mxu0 0
    %122 = vmatpush2.bf16.msra.mxu0 0
    %123 = vmatprep.mubr.bf16.mxu0 0
    %124 = vmatmul.mubr.bf16.gmra.mxu0 %v89
    %v125 = vpop.f32.mrf.mxu0
    %v126 = vadd.f32 0.0, %v125
    %v127 = vpop.f32.mrf.mxu0
    %v128 = vpop.f32.mrf.mxu0
    %v129 = vpop.f32.mrf.mxu0
    %130 = vdwg.mxu0
    %s131 = scalar_lea.vmem [#allocation2], 16
    %v132 = vld [vmem:[%s131] sm:$0xf]
    %v133 = vld [vmem:[%s131 + $0x4] sm:$0xf]
    %v134 = vld [vmem:[%s131 + $0x8] sm:$0xf]
    %v135 = vld [vmem:[%s131 + $0xc] sm:$0xf]
    %v140 = vunpack.c.l.b16 %v132
    %v141 = vunpack.c.l.b16 %v133
    %v142 = vunpack.c.l.b16 %v134
    %v143 = vunpack.c.l.b16 %v135
    %v144 = vpack.c.b16 %v141, %v140
    %v145 = vpack.c.b16 %v143, %v142
    %148 = vmatprep.subr.bf16.mxu0 0
    %149 = vmatpush1.bf16.msra.mxu0 0
    %150 = vmatprep.subr.bf16.mxu0 0
    %151 = vmatpush1.bf16.msra.mxu0 0
    %152 = vmatprep.subr.bf16.mxu0 0
    %153 = vmatpush1.bf16.msra.mxu0 0
    %154 = vmatprep.subr.bf16.mxu0 0
    %155 = vmatpush1.bf16.msra.mxu0 0
    %156 = vmatprep.subr.bf16.mxu0 0
    %157 = vmatpush1.bf16.msra.mxu0 0
    %158 = vmatprep.subr.bf16.mxu0 0
    %159 = vmatpush1.bf16.msra.mxu0 0
    %160 = vmatprep.subr.bf16.mxu0 0
    %161 = vmatpush1.bf16.msra.mxu0 %v145
    %162 = vmatprep.subr.bf16.mxu0 0
    %163 = vmatpush1.bf16.msra.mxu0 %v144
    %164 = vmatprep.subr.bf16.mxu0 0
    %165 = vmatpush2.bf16.msra.mxu0 0
    %166 = vmatprep.subr.bf16.mxu0 0
    %167 = vmatpush2.bf16.msra.mxu0 0
    %168 = vmatprep.subr.bf16.mxu0 0
    %169 = vmatpush2.bf16.msra.mxu0 0
    %170 = vmatprep.subr.bf16.mxu0 0
    %171 = vmatpush2.bf16.msra.mxu0 0
    %172 = vmatprep.subr.bf16.mxu0 0
    %173 = vmatpush2.bf16.msra.mxu0 0
    %174 = vmatprep.subr.bf16.mxu0 0
    %175 = vmatpush2.bf16.msra.mxu0 0
    %176 = vmatprep.subr.bf16.mxu0 0
    %177 = vmatpush2.bf16.msra.mxu0 0
    %178 = vmatprep.subr.bf16.mxu0 0
    %179 = vmatpush2.bf16.msra.mxu0 0
    %180 = vmatprep.mubr.bf16.mxu0 0
    %181 = vmatmul.mubr.bf16.gmra.mxu0 %v89
    %v182 = vpop.f32.mrf.mxu0
    %v183 = vadd.f32 0.0, %v182
    %v184 = vpop.f32.mrf.mxu0
    %v185 = vpop.f32.mrf.mxu0
    %v186 = vpop.f32.mrf.mxu0
    %187 = vdwg.mxu0
    %v188 = vmul.f32 %v126, %v183
    %v189 = vld [vmem:[%s4] sm:$0xff]
    %v190 = vld [vmem:[%s4 + $0x8] sm:$0xff]
    %v191 = vld [vmem:[%s4 + $0x10] sm:$0xff]
    %v192 = vld [vmem:[%s4 + $0x18] sm:$0xff]
    %v194 = vsel %vm40, %v188, 0
    %196 = vmatprep.subr.mxu0 0.0
    %197 = vmatpush1.msra.mxu0 0.0
    %198 = vmatprep.subr.mxu0 0.0
    %199 = vmatpush1.msra.mxu0 0.0
    %200 = vmatprep.subr.mxu0 0.0
    %201 = vmatpush1.msra.mxu0 0.0
    %202 = vmatprep.subr.mxu0 0.0
    %203 = vmatpush1.msra.mxu0 0.0
    %204 = vmatprep.subr.mxu0 0.0
    %205 = vmatpush1.msra.mxu0 0.0
    %206 = vmatprep.subr.mxu0 0.0
    %207 = vmatpush1.msra.mxu0 0.0
    %208 = vmatprep.subr.mxu0 0.0
    %209 = vmatpush1.msra.mxu0 0.0
    %210 = vmatprep.subr.mxu0 0.0
    %211 = vmatpush1.msra.mxu0 0.0
    %212 = vmatprep.subr.mxu0 0.0
    %213 = vmatpush1.msra.mxu0 0.0
    %214 = vmatprep.subr.mxu0 0.0
    %215 = vmatpush1.msra.mxu0 0.0
    %216 = vmatprep.subr.mxu0 0.0
    %217 = vmatpush1.msra.mxu0 0.0
    %218 = vmatprep.subr.mxu0 0.0
    %219 = vmatpush1.msra.mxu0 0.0
    %220 = vmatprep.subr.mxu0 0.0
    %221 = vmatpush1.msra.mxu0 %v192
    %222 = vmatprep.subr.mxu0 0.0
    %223 = vmatpush1.msra.mxu0 %v191
    %224 = vmatprep.subr.mxu0 0.0
    %225 = vmatpush1.msra.mxu0 %v190
    %226 = vmatprep.subr.mxu0 0.0
    %227 = vmatpush1.msra.mxu0 %v189
    %228 = vmatprep.subr.mxu0 0.0
    %229 = vmatpush2.msra.mxu0 0.0
    %230 = vmatprep.subr.mxu0 0.0
    %231 = vmatpush2.msra.mxu0 0.0
    %232 = vmatprep.subr.mxu0 0.0
    %233 = vmatpush2.msra.mxu0 0.0
    %234 = vmatprep.subr.mxu0 0.0
    %235 = vmatpush2.msra.mxu0 0.0
    %236 = vmatprep.subr.mxu0 0.0
    %237 = vmatpush2.msra.mxu0 0.0
    %238 = vmatprep.subr.mxu0 0.0
    %239 = vmatpush2.msra.mxu0 0.0
    %240 = vmatprep.subr.mxu0 0.0
    %241 = vmatpush2.msra.mxu0 0.0
    %242 = vmatprep.subr.mxu0 0.0
    %243 = vmatpush2.msra.mxu0 0.0
    %244 = vmatprep.subr.mxu0 0.0
    %245 = vmatpush2.msra.mxu0 0.0
    %246 = vmatprep.subr.mxu0 0.0
    %247 = vmatpush2.msra.mxu0 0.0
    %248 = vmatprep.subr.mxu0 0.0
    %249 = vmatpush2.msra.mxu0 0.0
    %250 = vmatprep.subr.mxu0 0.0
    %251 = vmatpush2.msra.mxu0 0.0
    %252 = vmatprep.subr.mxu0 0.0
    %253 = vmatpush2.msra.mxu0 0.0
    %254 = vmatprep.subr.mxu0 0.0
    %255 = vmatpush2.msra.mxu0 0.0
    %256 = vmatprep.subr.mxu0 0.0
    %257 = vmatpush2.msra.mxu0 0.0
    %258 = vmatprep.subr.mxu0 0.0
    %259 = vmatpush2.msra.mxu0 0.0
    %260 = vmatprep.mubr.f32.mxu0 0.0
    %261 = vmatmul.mubr.f32.gmra.mxu0 %v194
    %v262 = vpop.f32.mrf.mxu0
    %v263 = vadd.f32 0.0, %v262
    %v264 = vpop.f32.mrf.mxu0
    %265 = vdwg.mxu0
    %v266 = vtanh.pop %v263
    %v267 = vpack.c.bf16 %v266, %v266
    %v268 = vld [vmem:[%s5] sm:$0xf]
    %vm269 = vcmask 64512
    %v271 = vsel %vm269, %v267, 0
    %vm273 = vcmask 1043456
    %v275 = vsel %vm273, %v268, 0
    %277 = vmatprep.subr.bf16.mxu0 0
    %278 = vmatpush1.bf16.msra.mxu0 0
    %279 = vmatprep.subr.bf16.mxu0 0
    %280 = vmatpush1.bf16.msra.mxu0 0
    %281 = vmatprep.subr.bf16.mxu0 0
    %282 = vmatpush1.bf16.msra.mxu0 0
    %283 = vmatprep.subr.bf16.mxu0 0
    %284 = vmatpush1.bf16.msra.mxu0 0
    %285 = vmatprep.subr.bf16.mxu0 0
    %286 = vmatpush1.bf16.msra.mxu0 0
    %287 = vmatprep.subr.bf16.mxu0 0
    %288 = vmatpush1.bf16.msra.mxu0 0
    %289 = vmatprep.subr.bf16.mxu0 0
    %290 = vmatpush1.bf16.msra.mxu0 0
    %291 = vmatprep.subr.bf16.mxu0 0
    %292 = vmatpush1.bf16.msra.mxu0 %v275
    %293 = vmatprep.subr.bf16.mxu0 0
    %294 = vmatpush2.bf16.msra.mxu0 0
    %295 = vmatprep.subr.bf16.mxu0 0
    %296 = vmatpush2.bf16.msra.mxu0 0
    %297 = vmatprep.subr.bf16.mxu0 0
    %298 = vmatpush2.bf16.msra.mxu0 0
    %299 = vmatprep.subr.bf16.mxu0 0
    %300 = vmatpush2.bf16.msra.mxu0 0
    %301 = vmatprep.subr.bf16.mxu0 0
    %302 = vmatpush2.bf16.msra.mxu0 0
    %303 = vmatprep.subr.bf16.mxu0 0
    %304 = vmatpush2.bf16.msra.mxu0 0
    %305 = vmatprep.subr.bf16.mxu0 0
    %306 = vmatpush2.bf16.msra.mxu0 0
    %307 = vmatprep.subr.bf16.mxu0 0
    %308 = vmatpush2.bf16.msra.mxu0 0
    %309 = vmatprep.mubr.bf16.mxu0 0
    %310 = vmatmul.mubr.bf16.gmra.mxu0 %v271
    %v311 = vpop.f32.mrf.mxu0
    %v312 = vadd.f32 0.0, %v311
    %v313 = vpop.f32.mrf.mxu0
    %v314 = vpop.f32.mrf.mxu0
    %v315 = vpop.f32.mrf.mxu0
    %316 = vdwg.mxu0
    %s317 = scalar_lea.vmem [#allocation2], 32
    %v318 = vld [vmem:[%s317] sm:$0xf]
    %v319 = vld [vmem:[%s317 + $0x4] sm:$0xf]
    %v320 = vld [vmem:[%s317 + $0x8] sm:$0xf]
    %v321 = vld [vmem:[%s317 + $0xc] sm:$0xf]
    %s322 = scalar_lea.vmem [#allocation2], 48
    %v323 = vld [vmem:[%s322] sm:$0xf]
    %v324 = vld [vmem:[%s322 + $0x4] sm:$0xf]
    %v325 = vld [vmem:[%s322 + $0x8] sm:$0xf]
    %v326 = vld [vmem:[%s322 + $0xc] sm:$0xf]
    %v331 = vunpack.c.l.b16 %v323
    %v332 = vunpack.c.l.b16 %v324
    %v333 = vunpack.c.l.b16 %v325
    %v334 = vunpack.c.l.b16 %v326
    %v335 = vpack.c.b16 %v332, %v331
    %v336 = vpack.c.b16 %v334, %v333
    %339 = vmatprep.subr.bf16.mxu0 0
    %340 = vmatpush1.bf16.msra.mxu0 0
    %341 = vmatprep.subr.bf16.mxu0 0
    %342 = vmatpush1.bf16.msra.mxu0 0
    %343 = vmatprep.subr.bf16.mxu0 0
    %344 = vmatpush1.bf16.msra.mxu0 0
    %345 = vmatprep.subr.bf16.mxu0 0
    %346 = vmatpush1.bf16.msra.mxu0 0
    %347 = vmatprep.subr.bf16.mxu0 0
    %348 = vmatpush1.bf16.msra.mxu0 0
    %349 = vmatprep.subr.bf16.mxu0 0
    %350 = vmatpush1.bf16.msra.mxu0 0
    %351 = vmatprep.subr.bf16.mxu0 0
    %352 = vmatpush1.bf16.msra.mxu0 %v336
    %353 = vmatprep.subr.bf16.mxu0 0
    %354 = vmatpush1.bf16.msra.mxu0 %v335
    %355 = vmatprep.subr.bf16.mxu0 0
    %356 = vmatpush2.bf16.msra.mxu0 0
    %357 = vmatprep.subr.bf16.mxu0 0
    %358 = vmatpush2.bf16.msra.mxu0 0
    %359 = vmatprep.subr.bf16.mxu0 0
    %360 = vmatpush2.bf16.msra.mxu0 0
    %361 = vmatprep.subr.bf16.mxu0 0
    %362 = vmatpush2.bf16.msra.mxu0 0
    %363 = vmatprep.subr.bf16.mxu0 0
    %364 = vmatpush2.bf16.msra.mxu0 0
    %365 = vmatprep.subr.bf16.mxu0 0
    %366 = vmatpush2.bf16.msra.mxu0 0
    %367 = vmatprep.subr.bf16.mxu0 0
    %368 = vmatpush2.bf16.msra.mxu0 0
    %369 = vmatprep.subr.bf16.mxu0 0
    %370 = vmatpush2.bf16.msra.mxu0 0
    %371 = vmatprep.mubr.bf16.mxu0 0
    %372 = vmatmul.mubr.bf16.gmra.mxu0 %v89
    %v373 = vpop.f32.mrf.mxu0
    %v374 = vadd.f32 0.0, %v373
    %v375 = vpop.f32.mrf.mxu0
    %v376 = vpop.f32.mrf.mxu0
    %v377 = vpop.f32.mrf.mxu0
    %378 = vdwg.mxu0
    %v379 = vmul.f32 %v312, %v374
    %v384 = vunpack.c.l.b16 %v318
    %v385 = vunpack.c.l.b16 %v319
    %v386 = vunpack.c.l.b16 %v320
    %v387 = vunpack.c.l.b16 %v321
    %v388 = vpack.c.b16 %v385, %v384
    %v389 = vpack.c.b16 %v387, %v386
    %392 = vmatprep.subr.bf16.mxu0 0
    %393 = vmatpush1.bf16.msra.mxu0 0
    %394 = vmatprep.subr.bf16.mxu0 0
    %395 = vmatpush1.bf16.msra.mxu0 0
    %396 = vmatprep.subr.bf16.mxu0 0
    %397 = vmatpush1.bf16.msra.mxu0 0
    %398 = vmatprep.subr.bf16.mxu0 0
    %399 = vmatpush1.bf16.msra.mxu0 0
    %400 = vmatprep.subr.bf16.mxu0 0
    %401 = vmatpush1.bf16.msra.mxu0 0
    %402 = vmatprep.subr.bf16.mxu0 0
    %403 = vmatpush1.bf16.msra.mxu0 0
    %404 = vmatprep.subr.bf16.mxu0 0
    %405 = vmatpush1.bf16.msra.mxu0 %v389
    %406 = vmatprep.subr.bf16.mxu0 0
    %407 = vmatpush1.bf16.msra.mxu0 %v388
    %408 = vmatprep.subr.bf16.mxu0 0
    %409 = vmatpush2.bf16.msra.mxu0 0
    %410 = vmatprep.subr.bf16.mxu0 0
    %411 = vmatpush2.bf16.msra.mxu0 0
    %412 = vmatprep.subr.bf16.mxu0 0
    %413 = vmatpush2.bf16.msra.mxu0 0
    %414 = vmatprep.subr.bf16.mxu0 0
    %415 = vmatpush2.bf16.msra.mxu0 0
    %416 = vmatprep.subr.bf16.mxu0 0
    %417 = vmatpush2.bf16.msra.mxu0 0
    %418 = vmatprep.subr.bf16.mxu0 0
    %419 = vmatpush2.bf16.msra.mxu0 0
    %420 = vmatprep.subr.bf16.mxu0 0
    %421 = vmatpush2.bf16.msra.mxu0 0
    %422 = vmatprep.subr.bf16.mxu0 0
    %423 = vmatpush2.bf16.msra.mxu0 0
    %424 = vmatprep.mubr.bf16.mxu0 0
    %425 = vmatmul.mubr.bf16.gmra.mxu0 %v89
    %v426 = vpop.f32.mrf.mxu0
    %v427 = vadd.f32 %v379, %v426
    %v428 = vpop.f32.mrf.mxu0
    %v429 = vpop.f32.mrf.mxu0
    %v430 = vpop.f32.mrf.mxu0
    %431 = vdwg.mxu0
    %v432 = vadd.f32 %v427, %v39
    %433 = vst.msk [vmem:[#allocation5] sm:$0xff] %vm40, %v432
    // Predicated region
    $region30: #{tpu_custom_call.1} parent=1 // pred_check
      _
    $region31: #{tpu_custom_call.1} parent=1 // pred_check_branch
      %435 = sbr.rel (0) target = $region33
    $region32: #{tpu_custom_call.1} parent=1 // pred_region
      %s437 = ssub.s32 128, 128
      %438 = vsyncadd [#allocation4], %s437
      %s440 = sshll.u32 [#allocation5], 4
      %s441 = int_to_ptr.vmem [resolvable:$true] %s440
      %443 = dma.vmem_to_hbm [thread:$0]  %s441, 128, %s6, [#allocation4]
    $region33: #{tpu_custom_call.1} parent=1 // pred_fallthru
      _
    // Predicated region
    $region34: #{tpu_custom_call.1} parent=1 // pred_check
      _
    $region35: #{tpu_custom_call.1} parent=1 // pred_check_branch
      %445 = sbr.rel (0) target = $region37
    $region36: #{tpu_custom_call.1} parent=1 // pred_region
      %446 = dma.done [#allocation4], 128
    $region37: #{tpu_custom_call.1} parent=1 // pred_fallthru
      _
    %447 = vsyncpa [#allocation3], 1
    %448 = vsyncpa [#allocation4], 1

// kernel: tpu_custom_call.1
$region0: #{tpu_custom_call.1}
  #allocation0 [shape = 'u32[]', space=smem, size = 0x4, offset = 0x4, fixed_abs, tag = 'smem constant byte address 0x4 - core index']
  #allocation1 [shape = 'u32[144,128]{1,0:T(1,128)}', space=vmem, size = 0x12000, scoped, tag = 'internal scratch']
  %s0 = inlined_call_operand.vmem [shape: f32[8,32], index: 0, kind: input, shape index: {}]
  %s1 = inlined_call_operand.hbm [shape: bf16[4,32,32], index: 1, kind: input, shape index: {}]
  %s2 = inlined_call_operand.vmem [shape: f32[1,32], index: 2, kind: input, shape index: {}]
  %s3 = inlined_call_operand.vmem [shape: f32[1,32], index: 3, kind: input, shape index: {}]
  %s4 = inlined_call_operand.vmem [shape: f32[32,8], index: 4, kind: input, shape index: {}]
  %s5 = inlined_call_operand.vmem [shape: bf16[8,32], index: 5, kind: input, shape index: {}]
  %s6 = inlined_call_operand.hbm [shape: f32[8,32], index: 6, kind: output, shape index: {}]
  %s7 = sld [smem:[#allocation0]]
  $region38: #{tpu_custom_call.1} parent=0
    _
  %s9 = ssub.s32 1, %s7
  %s10 = scalar_select 0, %s9, %s7
  $region1: #{tpu_custom_call.1} parent=0
    #allocation2 [shape = 'u8[32768]{0}', space=vmem, size = 0x8000, scoped, tag = 'input window, operand 1, single buffered']
    #allocation3 [shape = 's32[1]{0}', space=sflag, size = 0x4, scoped, tag = 'scoped memory for tpu_custom_call.1']
    #allocation4 [shape = 's32[1]{0}', space=sflag, size = 0x4, scoped, tag = 'scoped memory for tpu_custom_call.1']
    #allocation5 [shape = 'u8[4096]{0}', space=vmem, size = 0x1000, scoped, tag = 'output window, operand 0, single buffered']
    %11 = vsyncpa [#allocation3], 0
    %12 = vsyncpa [#allocation4], 0
    // Predicated region
    $region2: #{tpu_custom_call.1} parent=1 // pred_check
      _
    $region3: #{tpu_custom_call.1} parent=1 // pred_check_branch
      %14 = sbr.rel (0) target = $region5
    $region4: #{tpu_custom_call.1} parent=1 // pred_region
      _
    $region5: #{tpu_custom_call.1} parent=1 // pred_fallthru
      _
    // Predicated region
    $region6: #{tpu_custom_call.1} parent=1 // pred_check
      _
    $region7: #{tpu_custom_call.1} parent=1 // pred_check_branch
      %16 = sbr.rel (0) target = $region9
    $region8: #{tpu_custom_call.1} parent=1 // pred_region
      %s18 = ssub.s32 1024, 1024
      %19 = vsyncadd [#allocation3], %s18
      %s20 = sshll.u32 [#allocation2], 4
      %s21 = int_to_ptr.vmem [resolvable:$true] %s20
      %26 = dma.hbm_to_vmem [thread:$0]  %s1, 1024, %s21, [#allocation3], 64, 64, 4
    $region9: #{tpu_custom_call.1} parent=1 // pred_fallthru
      _
    // Predicated region
    $region10: #{tpu_custom_call.1} parent=1 // pred_check
      _
    $region11: #{tpu_custom_call.1} parent=1 // pred_check_branch
      %28 = sbr.rel (0) target = $region13
    $region12: #{tpu_custom_call.1} parent=1 // pred_region
      _
    $region13: #{tpu_custom_call.1} parent=1 // pred_fallthru
      _
    // Predicated region
    $region14: #{tpu_custom_call.1} parent=1 // pred_check
      _
    $region15: #{tpu_custom_call.1} parent=1 // pred_check_branch
      %30 = sbr.rel (0) target = $region17
    $region16: #{tpu_custom_call.1} parent=1 // pred_region
      _
    $region17: #{tpu_custom_call.1} parent=1 // pred_fallthru
      _
    // Predicated region
    $region18: #{tpu_custom_call.1} parent=1 // pred_check
      _
    $region19: #{tpu_custom_call.1} parent=1 // pred_check_branch
      %32 = sbr.rel (0) target = $region21
    $region20: #{tpu_custom_call.1} parent=1 // pred_region
      _
    $region21: #{tpu_custom_call.1} parent=1 // pred_fallthru
      _
    // Predicated region
    $region22: #{tpu_custom_call.1} parent=1 // pred_check
      _
    $region23: #{tpu_custom_call.1} parent=1 // pred_check_branch
      %34 = sbr.rel (0) target = $region25
    $region24: #{tpu_custom_call.1} parent=1 // pred_region
      _
    $region25: #{tpu_custom_call.1} parent=1 // pred_fallthru
      _
    // Predicated region
    $region26: #{tpu_custom_call.1} parent=1 // pred_check
      _
    $region27: #{tpu_custom_call.1} parent=1 // pred_check_branch
      %36 = sbr.rel (0) target = $region29
    $region28: #{tpu_custom_call.1} parent=1 // pred_region
      %37 = dma.done [#allocation3], 1024
    $region29: #{tpu_custom_call.1} parent=1 // pred_fallthru
      _
    %v39 = vld [vmem:[%s0] sm:$0xff]
    %vm40 = vcmask 261120
    %v41 = vsel %vm40, %v39, 0.0
    %42 = vadd.xlane.f32.xlu0 %v41
    %v43 = vpop.xlane.xlu0 %42
    %v44 = vrcp.pop 32.0
    %v45 = vmul.f32 %v43, %v44
    %v46 = vsub.f32 %v39, %v45
    %v47 = vmul.f32 %v46, %v46
    %v48 = vsel %vm40, %v47, 0.0
    %49 = vadd.xlane.f32.xlu0 %v48
    %v50 = vpop.xlane.xlu0 %49
    %v51 = vmul.f32 %v50, %v44
    %v52 = vadd.f32 %v51, 1e-06
    %v53 = vrsqrt.pop %v52
    %v54 = vmul.f32 %v46, %v53
    %v55 = vld [vmem:[%s2] sm:$0x1]
    %v57 = vlaneseq
    %v58 = vshrl.u32 %v57, 7
    %v59 = vsub.s32 0, %v58
    %v60 = vrot.slane %v55, %v59
    %v62 = vmul.f32 %v54, %v60
    %v63 = vld [vmem:[%s3] sm:$0x1]
    %v65 = vlaneseq
    %v66 = vshrl.u32 %v65, 7
    %v67 = vsub.s32 0, %v66
    %v68 = vrot.slane %v63, %v67
    %v70 = vadd.f32 %v62, %v68
    %v71 = vpack.c.bf16 %v70, %v70
    %v72 = vld [vmem:[#allocation2] sm:$0xf]
    %v73 = vld [vmem:[#allocation2 + $0x4] sm:$0xf]
    %v74 = vld [vmem:[#allocation2 + $0x8] sm:$0xf]
    %v75 = vld [vmem:[#allocation2 + $0xc] sm:$0xf]
    %v80 = vunpack.c.l.b16 %v72
    %v81 = vunpack.c.l.b16 %v73
    %v82 = vunpack.c.l.b16 %v74
    %v83 = vunpack.c.l.b16 %v75
    %v84 = vpack.c.b16 %v81, %v80
    %v85 = vpack.c.b16 %v83, %v82
    %v89 = vsel %vm40, %v71, 0
    %91 = vmatprep.subr.bf16.mxu0 0
    %92 = vmatpush1.bf16.msra.mxu0 0
    %93 = vmatprep.subr.bf16.mxu0 0
    %94 = vmatpush1.bf16.msra.mxu0 0
    %95 = vmatprep.subr.bf16.mxu0 0
    %96 = vmatpush1.bf16.msra.mxu0 0
    %97 = vmatprep.subr.bf16.mxu0 0
    %98 = vmatpush1.bf16.msra.mxu0 0
    %99 = vmatprep.subr.bf16.mxu0 0
    %100 = vmatpush1.bf16.msra.mxu0 0
    %101 = vmatprep.subr.bf16.mxu0 0
    %102 = vmatpush1.bf16.msra.mxu0 0
    %103 = vmatprep.subr.bf16.mxu0 0
    %104 = vmatpush1.bf16.msra.mxu0 %v85
    %105 = vmatprep.subr.bf16.mxu0 0
    %106 = vmatpush1.bf16.msra.mxu0 %v84
    %107 = vmatprep.subr.bf16.mxu0 0
    %108 = vmatpush2.bf16.msra.mxu0 0
    %109 = vmatprep.subr.bf16.mxu0 0
    %110 = vmatpush2.bf16.msra.mxu0 0
    %111 = vmatprep.subr.bf16.mxu0 0
    %112 = vmatpush2.bf16.msra.mxu0 0
    %113 = vmatprep.subr.bf16.mxu0 0
    %114 = vmatpush2.bf16.msra.mxu0 0
    %115 = vmatprep.subr.bf16.mxu0 0
    %116 = vmatpush2.bf16.msra.mxu0 0
    %117 = vmatprep.subr.bf16.mxu0 0
    %118 = vmatpush2.bf16.msra.mxu0 0
    %119 = vmatprep.subr.bf16.mxu0 0
    %120 = vmatpush2.bf16.msra.mxu0 0
    %121 = vmatprep.subr.bf16.mxu0 0
    %122 = vmatpush2.bf16.msra.mxu0 0
    %123 = vmatprep.mubr.bf16.mxu0 0
    %124 = vmatmul.mubr.bf16.gmra.mxu0 %v89
    %v125 = vpop.f32.mrf.mxu0
    %v126 = vadd.f32 0.0, %v125
    %v127 = vpop.f32.mrf.mxu0
    %v128 = vpop.f32.mrf.mxu0
    %v129 = vpop.f32.mrf.mxu0
    %130 = vdwg.mxu0
    %s131 = scalar_lea.vmem [#allocation2], 16
    %v132 = vld [vmem:[%s131] sm:$0xf]
    %v133 = vld [vmem:[%s131 + $0x4] sm:$0xf]
    %v134 = vld [vmem:[%s131 + $0x8] sm:$0xf]
    %v135 = vld [vmem:[%s131 + $0xc] sm:$0xf]
    %v140 = vunpack.c.l.b16 %v132
    %v141 = vunpack.c.l.b16 %v133
    %v142 = vunpack.c.l.b16 %v134
    %v143 = vunpack.c.l.b16 %v135
    %v144 = vpack.c.b16 %v141, %v140
    %v145 = vpack.c.b16 %v143, %v142
    %148 = vmatprep.subr.bf16.mxu0 0
    %149 = vmatpush1.bf16.msra.mxu0 0
    %150 = vmatprep.subr.bf16.mxu0 0
    %151 = vmatpush1.bf16.msra.mxu0 0
    %152 = vmatprep.subr.bf16.mxu0 0
    %153 = vmatpush1.bf16.msra.mxu0 0
    %154 = vmatprep.subr.bf16.mxu0 0
    %155 = vmatpush1.bf16.msra.mxu0 0
    %156 = vmatprep.subr.bf16.mxu0 0
    %157 = vmatpush1.bf16.msra.mxu0 0
    %158 = vmatprep.subr.bf16.mxu0 0
    %159 = vmatpush1.bf16.msra.mxu0 0
    %160 = vmatprep.subr.bf16.mxu0 0
    %161 = vmatpush1.bf16.msra.mxu0 %v145
    %162 = vmatprep.subr.bf16.mxu0 0
    %163 = vmatpush1.bf16.msra.mxu0 %v144
    %164 = vmatprep.subr.bf16.mxu0 0
    %165 = vmatpush2.bf16.msra.mxu0 0
    %166 = vmatprep.subr.bf16.mxu0 0
    %167 = vmatpush2.bf16.msra.mxu0 0
    %168 = vmatprep.subr.bf16.mxu0 0
    %169 = vmatpush2.bf16.msra.mxu0 0
    %170 = vmatprep.subr.bf16.mxu0 0
    %171 = vmatpush2.bf16.msra.mxu0 0
    %172 = vmatprep.subr.bf16.mxu0 0
    %173 = vmatpush2.bf16.msra.mxu0 0
    %174 = vmatprep.subr.bf16.mxu0 0
    %175 = vmatpush2.bf16.msra.mxu0 0
    %176 = vmatprep.subr.bf16.mxu0 0
    %177 = vmatpush2.bf16.msra.mxu0 0
    %178 = vmatprep.subr.bf16.mxu0 0
    %179 = vmatpush2.bf16.msra.mxu0 0
    %180 = vmatprep.mubr.bf16.mxu0 0
    %181 = vmatmul.mubr.bf16.gmra.mxu0 %v89
    %v182 = vpop.f32.mrf.mxu0
    %v183 = vadd.f32 0.0, %v182
    %v184 = vpop.f32.mrf.mxu0
    %v185 = vpop.f32.mrf.mxu0
    %v186 = vpop.f32.mrf.mxu0
    %187 = vdwg.mxu0
    %v188 = vmul.f32 %v126, %v183
    %v189 = vld [vmem:[%s4] sm:$0xff]
    %v190 = vld [vmem:[%s4 + $0x8] sm:$0xff]
    %v191 = vld [vmem:[%s4 + $0x10] sm:$0xff]
    %v192 = vld [vmem:[%s4 + $0x18] sm:$0xff]
    %v194 = vsel %vm40, %v188, 0
    %196 = vmatprep.subr.mxu0 0.0
    %197 = vmatpush1.msra.mxu0 0.0
    %198 = vmatprep.subr.mxu0 0.0
    %199 = vmatpush1.msra.mxu0 0.0
    %200 = vmatprep.subr.mxu0 0.0
    %201 = vmatpush1.msra.mxu0 0.0
    %202 = vmatprep.subr.mxu0 0.0
    %203 = vmatpush1.msra.mxu0 0.0
    %204 = vmatprep.subr.mxu0 0.0
    %205 = vmatpush1.msra.mxu0 0.0
    %206 = vmatprep.subr.mxu0 0.0
    %207 = vmatpush1.msra.mxu0 0.0
    %208 = vmatprep.subr.mxu0 0.0
    %209 = vmatpush1.msra.mxu0 0.0
    %210 = vmatprep.subr.mxu0 0.0
    %211 = vmatpush1.msra.mxu0 0.0
    %212 = vmatprep.subr.mxu0 0.0
    %213 = vmatpush1.msra.mxu0 0.0
    %214 = vmatprep.subr.mxu0 0.0
    %215 = vmatpush1.msra.mxu0 0.0
    %216 = vmatprep.subr.mxu0 0.0
    %217 = vmatpush1.msra.mxu0 0.0
    %218 = vmatprep.subr.mxu0 0.0
    %219 = vmatpush1.msra.mxu0 0.0
    %220 = vmatprep.subr.mxu0 0.0
    %221 = vmatpush1.msra.mxu0 %v192
    %222 = vmatprep.subr.mxu0 0.0
    %223 = vmatpush1.msra.mxu0 %v191
    %224 = vmatprep.subr.mxu0 0.0
    %225 = vmatpush1.msra.mxu0 %v190
    %226 = vmatprep.subr.mxu0 0.0
    %227 = vmatpush1.msra.mxu0 %v189
    %228 = vmatprep.subr.mxu0 0.0
    %229 = vmatpush2.msra.mxu0 0.0
    %230 = vmatprep.subr.mxu0 0.0
    %231 = vmatpush2.msra.mxu0 0.0
    %232 = vmatprep.subr.mxu0 0.0
    %233 = vmatpush2.msra.mxu0 0.0
    %234 = vmatprep.subr.mxu0 0.0
    %235 = vmatpush2.msra.mxu0 0.0
    %236 = vmatprep.subr.mxu0 0.0
    %237 = vmatpush2.msra.mxu0 0.0
    %238 = vmatprep.subr.mxu0 0.0
    %239 = vmatpush2.msra.mxu0 0.0
    %240 = vmatprep.subr.mxu0 0.0
    %241 = vmatpush2.msra.mxu0 0.0
    %242 = vmatprep.subr.mxu0 0.0
    %243 = vmatpush2.msra.mxu0 0.0
    %244 = vmatprep.subr.mxu0 0.0
    %245 = vmatpush2.msra.mxu0 0.0
    %246 = vmatprep.subr.mxu0 0.0
    %247 = vmatpush2.msra.mxu0 0.0
    %248 = vmatprep.subr.mxu0 0.0
    %249 = vmatpush2.msra.mxu0 0.0
    %250 = vmatprep.subr.mxu0 0.0
    %251 = vmatpush2.msra.mxu0 0.0
    %252 = vmatprep.subr.mxu0 0.0
    %253 = vmatpush2.msra.mxu0 0.0
    %254 = vmatprep.subr.mxu0 0.0
    %255 = vmatpush2.msra.mxu0 0.0
    %256 = vmatprep.subr.mxu0 0.0
    %257 = vmatpush2.msra.mxu0 0.0
    %258 = vmatprep.subr.mxu0 0.0
    %259 = vmatpush2.msra.mxu0 0.0
    %260 = vmatprep.mubr.f32.mxu0 0.0
    %261 = vmatmul.mubr.f32.gmra.mxu0 %v194
    %v262 = vpop.f32.mrf.mxu0
    %v263 = vadd.f32 0.0, %v262
    %v264 = vpop.f32.mrf.mxu0
    %265 = vdwg.mxu0
    %v266 = vtanh.pop %v263
    %v267 = vpack.c.bf16 %v266, %v266
    %v268 = vld [vmem:[%s5] sm:$0xf]
    %vm269 = vcmask 64512
    %v271 = vsel %vm269, %v267, 0
    %vm273 = vcmask 1043456
    %v275 = vsel %vm273, %v268, 0
    %277 = vmatprep.subr.bf16.mxu0 0
    %278 = vmatpush1.bf16.msra.mxu0 0
    %279 = vmatprep.subr.bf16.mxu0 0
    %280 = vmatpush1.bf16.msra.mxu0 0
    %281 = vmatprep.subr.bf16.mxu0 0
    %282 = vmatpush1.bf16.msra.mxu0 0
    %283 = vmatprep.subr.bf16.mxu0 0
    %284 = vmatpush1.bf16.msra.mxu0 0
    %285 = vmatprep.subr.bf16.mxu0 0
    %286 = vmatpush1.bf16.msra.mxu0 0
    %287 = vmatprep.subr.bf16.mxu0 0
    %288 = vmatpush1.bf16.msra.mxu0 0
    %289 = vmatprep.subr.bf16.mxu0 0
    %290 = vmatpush1.bf16.msra.mxu0 0
    %291 = vmatprep.subr.bf16.mxu0 0
    %292 = vmatpush1.bf16.msra.mxu0 %v275
    %293 = vmatprep.subr.bf16.mxu0 0
    %294 = vmatpush2.bf16.msra.mxu0 0
    %295 = vmatprep.subr.bf16.mxu0 0
    %296 = vmatpush2.bf16.msra.mxu0 0
    %297 = vmatprep.subr.bf16.mxu0 0
    %298 = vmatpush2.bf16.msra.mxu0 0
    %299 = vmatprep.subr.bf16.mxu0 0
    %300 = vmatpush2.bf16.msra.mxu0 0
    %301 = vmatprep.subr.bf16.mxu0 0
    %302 = vmatpush2.bf16.msra.mxu0 0
    %303 = vmatprep.subr.bf16.mxu0 0
    %304 = vmatpush2.bf16.msra.mxu0 0
    %305 = vmatprep.subr.bf16.mxu0 0
    %306 = vmatpush2.bf16.msra.mxu0 0
    %307 = vmatprep.subr.bf16.mxu0 0
    %308 = vmatpush2.bf16.msra.mxu0 0
    %309 = vmatprep.mubr.bf16.mxu0 0
    %310 = vmatmul.mubr.bf16.gmra.mxu0 %v271
    %v311 = vpop.f32.mrf.mxu0
    %v312 = vadd.f32 0.0, %v311
    %v313 = vpop.f32.mrf.mxu0
    %v314 = vpop.f32.mrf.mxu0
    %v315 = vpop.f32.mrf.mxu0
    %316 = vdwg.mxu0
    %s317 = scalar_lea.vmem [#allocation2], 32
    %v318 = vld [vmem:[%s317] sm:$0xf]
    %v319 = vld [vmem:[%s317 + $0x4] sm:$0xf]
    %v320 = vld [vmem:[%s317 + $0x8] sm:$0xf]
    %v321 = vld [vmem:[%s317 + $0xc] sm:$0xf]
    %s322 = scalar_lea.vmem [#allocation2], 48
    %v323 = vld [vmem:[%s322] sm:$0xf]
    %v324 = vld [vmem:[%s322 + $0x4] sm:$0xf]
    %v325 = vld [vmem:[%s322 + $0x8] sm:$0xf]
    %v326 = vld [vmem:[%s322 + $0xc] sm:$0xf]
    %v331 = vunpack.c.l.b16 %v323
    %v332 = vunpack.c.l.b16 %v324
    %v333 = vunpack.c.l.b16 %v325
    %v334 = vunpack.c.l.b16 %v326
    %v335 = vpack.c.b16 %v332, %v331
    %v336 = vpack.c.b16 %v334, %v333
    %339 = vmatprep.subr.bf16.mxu0 0
    %340 = vmatpush1.bf16.msra.mxu0 0
    %341 = vmatprep.subr.bf16.mxu0 0
    %342 = vmatpush1.bf16.msra.mxu0 0
    %343 = vmatprep.subr.bf16.mxu0 0
    %344 = vmatpush1.bf16.msra.mxu0 0
    %345 = vmatprep.subr.bf16.mxu0 0
    %346 = vmatpush1.bf16.msra.mxu0 0
    %347 = vmatprep.subr.bf16.mxu0 0
    %348 = vmatpush1.bf16.msra.mxu0 0
    %349 = vmatprep.subr.bf16.mxu0 0
    %350 = vmatpush1.bf16.msra.mxu0 0
    %351 = vmatprep.subr.bf16.mxu0 0
    %352 = vmatpush1.bf16.msra.mxu0 %v336
    %353 = vmatprep.subr.bf16.mxu0 0
    %354 = vmatpush1.bf16.msra.mxu0 %v335
    %355 = vmatprep.subr.bf16.mxu0 0
    %356 = vmatpush2.bf16.msra.mxu0 0
    %357 = vmatprep.subr.bf16.mxu0 0
    %358 = vmatpush2.bf16.msra.mxu0 0
    %359 = vmatprep.subr.bf16.mxu0 0
    %360 = vmatpush2.bf16.msra.mxu0 0
    %361 = vmatprep.subr.bf16.mxu0 0
    %362 = vmatpush2.bf16.msra.mxu0 0
    %363 = vmatprep.subr.bf16.mxu0 0
    %364 = vmatpush2.bf16.msra.mxu0 0
    %365 = vmatprep.subr.bf16.mxu0 0
    %366 = vmatpush2.bf16.msra.mxu0 0
    %367 = vmatprep.subr.bf16.mxu0 0
    %368 = vmatpush2.bf16.msra.mxu0 0
    %369 = vmatprep.subr.bf16.mxu0 0
    %370 = vmatpush2.bf16.msra.mxu0 0
    %371 = vmatprep.mubr.bf16.mxu0 0
    %372 = vmatmul.mubr.bf16.gmra.mxu0 %v89
    %v373 = vpop.f32.mrf.mxu0
    %v374 = vadd.f32 0.0, %v373
    %v375 = vpop.f32.mrf.mxu0
    %v376 = vpop.f32.mrf.mxu0
    %v377 = vpop.f32.mrf.mxu0
    %378 = vdwg.mxu0
    %v379 = vmul.f32 %v312, %v374
    %v384 = vunpack.c.l.b16 %v318
    %v385 = vunpack.c.l.b16 %v319
    %v386 = vunpack.c.l.b16 %v320
    %v387 = vunpack.c.l.b16 %v321
    %v388 = vpack.c.b16 %v385, %v384
    %v389 = vpack.c.b16 %v387, %v386
    %392 = vmatprep.subr.bf16.mxu0 0
    %393 = vmatpush1.bf16.msra.mxu0 0
    %394 = vmatprep.subr.bf16.mxu0 0
    %395 = vmatpush1.bf16.msra.mxu0 0
    %396 = vmatprep.subr.bf16.mxu0 0
    %397 = vmatpush1.bf16.msra.mxu0 0
    %398 = vmatprep.subr.bf16.mxu0 0
    %399 = vmatpush1.bf16.msra.mxu0 0
    %400 = vmatprep.subr.bf16.mxu0 0
    %401 = vmatpush1.bf16.msra.mxu0 0
    %402 = vmatprep.subr.bf16.mxu0 0
    %403 = vmatpush1.bf16.msra.mxu0 0
    %404 = vmatprep.subr.bf16.mxu0 0
    %405 = vmatpush1.bf16.msra.mxu0 %v389
    %406 = vmatprep.subr.bf16.mxu0 0
    %407 = vmatpush1.bf16.msra.mxu0 %v388
    %408 = vmatprep.subr.bf16.mxu0 0
    %409 = vmatpush2.bf16.msra.mxu0 0
    %410 = vmatprep.subr.bf16.mxu0 0
    %411 = vmatpush2.bf16.msra.mxu0 0
    %412 = vmatprep.subr.bf16.mxu0 0
    %413 = vmatpush2.bf16.msra.mxu0 0
    %414 = vmatprep.subr.bf16.mxu0 0
    %415 = vmatpush2.bf16.msra.mxu0 0
    %416 = vmatprep.subr.bf16.mxu0 0
    %417 = vmatpush2.bf16.msra.mxu0 0
    %418 = vmatprep.subr.bf16.mxu0 0
    %419 = vmatpush2.bf16.msra.mxu0 0
    %420 = vmatprep.subr.bf16.mxu0 0
    %421 = vmatpush2.bf16.msra.mxu0 0
    %422 = vmatprep.subr.bf16.mxu0 0
    %423 = vmatpush2.bf16.msra.mxu0 0
    %424 = vmatprep.mubr.bf16.mxu0 0
    %425 = vmatmul.mubr.bf16.gmra.mxu0 %v89
    %v426 = vpop.f32.mrf.mxu0
    %v427 = vadd.f32 %v379, %v426
    %v428 = vpop.f32.mrf.mxu0
    %v429 = vpop.f32.mrf.mxu0
    %v430 = vpop.f32.mrf.mxu0
    %431 = vdwg.mxu0
    %v432 = vadd.f32 %v427, %v39
    %433 = vst.msk [vmem:[#allocation5] sm:$0xff] %vm40, %v432
    // Predicated region
    $region30: #{tpu_custom_call.1} parent=1 // pred_check
      _
    $region31: #{tpu_custom_call.1} parent=1 // pred_check_branch
      %435 = sbr.rel (0) target = $region33
    $region32: #{tpu_custom_call.1} parent=1 // pred_region
      %s437 = ssub.s32 128, 128
      %438 = vsyncadd [#allocation4], %s437
      %s440 = sshll.u32 [#allocation5], 4
      %s441 = int_to_ptr.vmem [resolvable:$true] %s440
      %443 = dma.vmem_to_hbm [thread:$0]  %s441, 128, %s6, [#allocation4]
    $region33: #{tpu_custom_call.1} parent=1 // pred_fallthru
      _
    // Predicated region
    $region34: #{tpu_custom_call.1} parent=1 // pred_check
      _
    $region35: #{tpu_custom_call.1} parent=1 // pred_check_branch
      %445 = sbr.rel (0) target = $region37
    $region36: #{tpu_custom_call.1} parent=1 // pred_region
      %446 = dma.done [#allocation4], 128
    $region37: #{tpu_custom_call.1} parent=1 // pred_fallthru
      _
    %447 = vsyncpa [#allocation3], 1
    %448 = vsyncpa [#allocation4], 1

</llo_original>
